<compile_context>
chip_gen: v7x
topology: tpu7x:2x2x1
jax: 0.10.0
libtpu: 0.0.40
codegen_flags: <defaults>
</compile_context>

<pallas_src>
import functools

import jax
import jax.numpy as jnp
from jax.experimental import pallas as pl
from jax.experimental.pallas import tpu as pltpu


def _gabor_kernel(num_orientations, kernel_size, filt_smem, x_ref, o_ref, xp_ref):
    """One grid step = one input channel ci (full batch+image, all O orientations).

    filt_smem: SMEM ref, flat [C*O*K*K] f32 filter taps (scalar prefetch).
    x_ref:     VMEM ref, [B, H, W] block of input channel ci (channel dim squeezed).
    o_ref:     VMEM ref, [B, O, H, W] block of output channels ci*O .. ci*O + O - 1.
    xp_ref:    VMEM scratch, [B, H + 2p, W_pad] f32, zero-haloed padded image.
    """
    ci = pl.program_id(0)
    K = kernel_size
    O = num_orientations
    p = K // 2
    B, H, W = x_ref.shape

    # ---- Build the zero-haloed image with ref-view stores only (no concatenates).
    # Halo strips are rewritten every step -> safe under parallel grid sharding.
    if p > 0:
        zrow = jnp.zeros((B, p, W + 2 * p), jnp.float32)
        xp_ref[:, 0:p, 0:W + 2 * p] = zrow                        # top halo rows
        xp_ref[:, p + H:H + 2 * p, 0:W + 2 * p] = zrow            # bottom halo rows
        zcol = jnp.zeros((B, H, p), jnp.float32)
        xp_ref[:, p:p + H, 0:p] = zcol                            # left halo cols
        xp_ref[:, p:p + H, p + W:W + 2 * p] = zcol                # right halo cols
    xp_ref[:, p:p + H, p:p + W] = x_ref[...].astype(jnp.float32)  # interior

    # ---- K*K VPU stencil for all O orientations from the same padded scratch.
    # Windows are static ref-view loads; taps are SMEM scalar broadcasts.
    base_ci = ci * (O * K * K)
    for oi in range(O):
        base = base_ci + oi * (K * K)
        row_accs = []
        for dy in range(K):
            acc = None
            for dx in range(K):
                tap = filt_smem[base + dy * K + dx]
                term = tap * xp_ref[:, dy:dy + H, dx:dx + W]
                acc = term if acc is None else acc + term
            row_accs.append(acc)                      # K independent FMA chains
        total = row_accs[0]
        for a in row_accs[1:]:
            total = total + a
        o_ref[:, oi:oi + 1, :, :] = total[:, None, :, :].astype(o_ref.dtype)


def gabor_filter(x, filters, *, num_channels, num_orientations, kernel_size):
    """x: [B, C, H, W]; filters: [C*O, K, K] (PyTorch parameter layout)."""
    B, C, H, W = x.shape
    O = num_orientations
    K = kernel_size
    assert C == num_channels
    assert filters.shape == (C * O, K, K)
    assert K % 2 == 1, "odd kernel_size required for same-size output"
    p = K // 2
    w_pad = ((W + 2 * p + 127) // 128) * 128          # lane-aligned padded width

    filt_flat = filters.reshape(-1).astype(jnp.float32)   # -> SMEM (scalar prefetch)
    kernel = functools.partial(_gabor_kernel, O, K)

    itemsize = x.dtype.itemsize
    cost = pl.CostEstimate(
        flops=2 * B * C * O * H * W * K * K,
        transcendentals=0,
        bytes_accessed=(B * C * H * W + B * C * O * H * W) * itemsize
        + filt_flat.size * 4,
    )

    return pl.pallas_call(
        kernel,
        out_shape=jax.ShapeDtypeStruct((B, C * O, H, W), x.dtype),
        grid_spec=pltpu.PrefetchScalarGridSpec(
            num_scalar_prefetch=1,
            grid=(C,),  # orientations fused into the step; one HBM read per channel
            in_specs=[
                # channel dim squeezed out of the kernel ref
                pl.BlockSpec((B, None, H, W), lambda ci, filt: (0, ci, 0, 0)),
            ],
            out_specs=pl.BlockSpec(
                (B, O, H, W), lambda ci, filt: (0, ci, 0, 0)
            ),
            scratch_shapes=[pltpu.VMEM((B, H + 2 * p, w_pad), jnp.float32)],
        ),
        compiler_params=pltpu.CompilerParams(
            dimension_semantics=("parallel",)
        ),
        cost_estimate=cost,
    )(filt_flat, x)


if __name__ == "__main__":
    # Module config: GaborFilter(num_channels=4, num_orientations=2, kernel_size=3,
    #                            sigma=1.0, theta=0.0)
    # sigma / theta are stored by the PyTorch module but unused in its forward.
    B, C, O, K, H, W = 2, 4, 2, 3, 16, 16
    key = jax.random.PRNGKey(0)
    kx, kf = jax.random.split(key)

    x = jax.random.normal(kx, (B, C, H, W), dtype=jnp.float32)
    filters = jax.random.normal(kf, (C * O, K, K), dtype=jnp.float32)  # ~ torch.randn

    out = gabor_filter(
        x, filters, num_channels=C, num_orientations=O, kernel_size=K
    )
    out = jax.block_until_ready(out)
    assert out.shape == (B, C * O, H, W)

    # Pure-JAX reference mirroring the PyTorch loop (conv2d == cross-correlation).
    p = K // 2
    gf = filters.reshape(C, O, K, K)
    refs = []
    for i in range(C):
        for j in range(O):
            f = gf[i, j][None, None]  # OIHW = [1, 1, K, K]
            r = jax.lax.conv_general_dilated(
                x[:, i:i + 1],
                f,
                window_strides=(1, 1),
                padding=[(p, p), (p, p)],
                dimension_numbers=("NCHW", "OIHW", "NCHW"),
            )
            refs.append(r)
    ref = jnp.concatenate(refs, axis=1)

    assert jnp.allclose(out, ref, atol=1e-4, rtol=1e-4), float(
        jnp.max(jnp.abs(out - ref))
    )

    print("KERNEL_OK")
</pallas_src>

<mosaic_0001>
module attributes {stable_mosaic.version = 11 : i64} {
  func.func @_gabor_kernel(%arg0: i32, %arg1: memref<72xf32, #tpu.memory_space<smem>>, %arg2: memref<2x1x16x16xf32, #tpu.memory_space<vmem>>, %arg3: memref<2x2x16x16xf32, #tpu.memory_space<vmem>>, %arg4: memref<2x18x128xf32, #tpu.memory_space<vmem>>) attributes {dimension_semantics = [#tpu.dimension_semantics<parallel>], iteration_bounds = array<i64: 4>, scalar_prefetch = 1 : i64, scratch_operands = 1 : i64, tpu.core_type = #tpu.core_type<tc>, window_params = [{transform_indices = @transform_0, window_bounds = array<i64: 2, 1, 16, 16>}, {transform_indices = @transform_1, window_bounds = array<i64: 2, 2, 16, 16>}]} {
    %cst = arith.constant 0.000000e+00 : f32
    %0 = vector.broadcast %cst : f32 to vector<2x1x18xf32>
    %c0 = arith.constant 0 : index
    %c0_0 = arith.constant 0 : index
    %c0_1 = arith.constant 0 : index
    %1 = vector.load %arg4[%c0, %c0_0, %c0_1] : memref<2x18x128xf32, #tpu.memory_space<vmem>>, vector<2x1x18xf32>
    tpu.vector_store %arg4[%c0, %c0_0, %c0_1], %0 {strides = array<i32>} : memref<2x18x128xf32, #tpu.memory_space<vmem>>, vector<2x1x18xf32>,
    %c0_2 = arith.constant 0 : index
    %c17 = arith.constant 17 : index
    %c0_3 = arith.constant 0 : index
    %2 = vector.load %arg4[%c0_2, %c17, %c0_3] : memref<2x18x128xf32, #tpu.memory_space<vmem>>, vector<2x1x18xf32>
    tpu.vector_store %arg4[%c0_2, %c17, %c0_3], %0 {strides = array<i32>} : memref<2x18x128xf32, #tpu.memory_space<vmem>>, vector<2x1x18xf32>,
    %cst_4 = arith.constant 0.000000e+00 : f32
    %3 = vector.broadcast %cst_4 : f32 to vector<2x16x1xf32>
    %c0_5 = arith.constant 0 : index
    %c1 = arith.constant 1 : index
    %c0_6 = arith.constant 0 : index
    %4 = vector.load %arg4[%c0_5, %c1, %c0_6] : memref<2x18x128xf32, #tpu.memory_space<vmem>>, vector<2x16x1xf32>
    tpu.vector_store %arg4[%c0_5, %c1, %c0_6], %3 {strides = array<i32>} : memref<2x18x128xf32, #tpu.memory_space<vmem>>, vector<2x16x1xf32>,
    %c0_7 = arith.constant 0 : index
    %c1_8 = arith.constant 1 : index
    %c17_9 = arith.constant 17 : index
    %5 = vector.load %arg4[%c0_7, %c1_8, %c17_9] : memref<2x18x128xf32, #tpu.memory_space<vmem>>, vector<2x16x1xf32>
    tpu.vector_store %arg4[%c0_7, %c1_8, %c17_9], %3 {strides = array<i32>} : memref<2x18x128xf32, #tpu.memory_space<vmem>>, vector<2x16x1xf32>,
    %c0_10 = arith.constant 0 : index
    %c0_11 = arith.constant 0 : index
    %c0_12 = arith.constant 0 : index
    %c0_13 = arith.constant 0 : index
    %6 = vector.load %arg2[%c0_10, %c0_11, %c0_12, %c0_13] : memref<2x1x16x16xf32, #tpu.memory_space<vmem>>, vector<2x1x16x16xf32>
    %7 = vector.shape_cast %6 : vector<2x1x16x16xf32> to vector<2x16x16xf32>
    %c0_14 = arith.constant 0 : index
    %c1_15 = arith.constant 1 : index
    %c1_16 = arith.constant 1 : index
    %8 = vector.load %arg4[%c0_14, %c1_15, %c1_16] : memref<2x18x128xf32, #tpu.memory_space<vmem>>, vector<2x16x16xf32>
    tpu.vector_store %arg4[%c0_14, %c1_15, %c1_16], %7 {strides = array<i32>} : memref<2x18x128xf32, #tpu.memory_space<vmem>>, vector<2x16x16xf32>,
    %c18_i32 = arith.constant 18 : i32
    %9 = arith.muli %arg0, %c18_i32 : i32
    %c0_i32 = arith.constant 0 : i32
    %10 = arith.addi %9, %c0_i32 : i32
    %c0_i32_17 = arith.constant 0 : i32
    %11 = arith.addi %10, %c0_i32_17 : i32
    %c0_i32_18 = arith.constant 0 : i32
    %12 = arith.addi %11, %c0_i32_18 : i32
    %13 = arith.index_cast %12 : i32 to index
    %14 = memref.load %arg1[%13] : memref<72xf32, #tpu.memory_space<smem>>
    %c0_19 = arith.constant 0 : index
    %c0_20 = arith.constant 0 : index
    %c0_21 = arith.constant 0 : index
    %15 = vector.load %arg4[%c0_19, %c0_20, %c0_21] : memref<2x18x128xf32, #tpu.memory_space<vmem>>, vector<2x16x16xf32>
    %16 = vector.broadcast %14 : f32 to vector<2x16x16xf32>
    %17 = arith.mulf %16, %15 : vector<2x16x16xf32>
    %c0_i32_22 = arith.constant 0 : i32
    %18 = arith.addi %10, %c0_i32_22 : i32
    %c1_i32 = arith.constant 1 : i32
    %19 = arith.addi %18, %c1_i32 : i32
    %20 = arith.index_cast %19 : i32 to index
    %21 = memref.load %arg1[%20] : memref<72xf32, #tpu.memory_space<smem>>
    %c0_23 = arith.constant 0 : index
    %c0_24 = arith.constant 0 : index
    %c1_25 = arith.constant 1 : index
    %22 = vector.load %arg4[%c0_23, %c0_24, %c1_25] : memref<2x18x128xf32, #tpu.memory_space<vmem>>, vector<2x16x16xf32>
    %23 = vector.broadcast %21 : f32 to vector<2x16x16xf32>
    %24 = arith.mulf %23, %22 : vector<2x16x16xf32>
    %25 = arith.addf %17, %24 : vector<2x16x16xf32>
    %c0_i32_26 = arith.constant 0 : i32
    %26 = arith.addi %10, %c0_i32_26 : i32
    %c2_i32 = arith.constant 2 : i32
    %27 = arith.addi %26, %c2_i32 : i32
    %28 = arith.index_cast %27 : i32 to index
    %29 = memref.load %arg1[%28] : memref<72xf32, #tpu.memory_space<smem>>
    %c0_27 = arith.constant 0 : index
    %c0_28 = arith.constant 0 : index
    %c2 = arith.constant 2 : index
    %30 = vector.load %arg4[%c0_27, %c0_28, %c2] : memref<2x18x128xf32, #tpu.memory_space<vmem>>, vector<2x16x16xf32>
    %31 = vector.broadcast %29 : f32 to vector<2x16x16xf32>
    %32 = arith.mulf %31, %30 : vector<2x16x16xf32>
    %33 = arith.addf %25, %32 : vector<2x16x16xf32>
    %c3_i32 = arith.constant 3 : i32
    %34 = arith.addi %10, %c3_i32 : i32
    %c0_i32_29 = arith.constant 0 : i32
    %35 = arith.addi %34, %c0_i32_29 : i32
    %36 = arith.index_cast %35 : i32 to index
    %37 = memref.load %arg1[%36] : memref<72xf32, #tpu.memory_space<smem>>
    %c0_30 = arith.constant 0 : index
    %c1_31 = arith.constant 1 : index
    %c0_32 = arith.constant 0 : index
    %38 = vector.load %arg4[%c0_30, %c1_31, %c0_32] : memref<2x18x128xf32, #tpu.memory_space<vmem>>, vector<2x16x16xf32>
    %39 = vector.broadcast %37 : f32 to vector<2x16x16xf32>
    %40 = arith.mulf %39, %38 : vector<2x16x16xf32>
    %c3_i32_33 = arith.constant 3 : i32
    %41 = arith.addi %10, %c3_i32_33 : i32
    %c1_i32_34 = arith.constant 1 : i32
    %42 = arith.addi %41, %c1_i32_34 : i32
    %43 = arith.index_cast %42 : i32 to index
    %44 = memref.load %arg1[%43] : memref<72xf32, #tpu.memory_space<smem>>
    %c0_35 = arith.constant 0 : index
    %c1_36 = arith.constant 1 : index
    %c1_37 = arith.constant 1 : index
    %45 = vector.load %arg4[%c0_35, %c1_36, %c1_37] : memref<2x18x128xf32, #tpu.memory_space<vmem>>, vector<2x16x16xf32>
    %46 = vector.broadcast %44 : f32 to vector<2x16x16xf32>
    %47 = arith.mulf %46, %45 : vector<2x16x16xf32>
    %48 = arith.addf %40, %47 : vector<2x16x16xf32>
    %c3_i32_38 = arith.constant 3 : i32
    %49 = arith.addi %10, %c3_i32_38 : i32
    %c2_i32_39 = arith.constant 2 : i32
    %50 = arith.addi %49, %c2_i32_39 : i32
    %51 = arith.index_cast %50 : i32 to index
    %52 = memref.load %arg1[%51] : memref<72xf32, #tpu.memory_space<smem>>
    %c0_40 = arith.constant 0 : index
    %c1_41 = arith.constant 1 : index
    %c2_42 = arith.constant 2 : index
    %53 = vector.load %arg4[%c0_40, %c1_41, %c2_42] : memref<2x18x128xf32, #tpu.memory_space<vmem>>, vector<2x16x16xf32>
    %54 = vector.broadcast %52 : f32 to vector<2x16x16xf32>
    %55 = arith.mulf %54, %53 : vector<2x16x16xf32>
    %56 = arith.addf %48, %55 : vector<2x16x16xf32>
    %c6_i32 = arith.constant 6 : i32
    %57 = arith.addi %10, %c6_i32 : i32
    %c0_i32_43 = arith.constant 0 : i32
    %58 = arith.addi %57, %c0_i32_43 : i32
    %59 = arith.index_cast %58 : i32 to index
    %60 = memref.load %arg1[%59] : memref<72xf32, #tpu.memory_space<smem>>
    %c0_44 = arith.constant 0 : index
    %c2_45 = arith.constant 2 : index
    %c0_46 = arith.constant 0 : index
    %61 = vector.load %arg4[%c0_44, %c2_45, %c0_46] : memref<2x18x128xf32, #tpu.memory_space<vmem>>, vector<2x16x16xf32>
    %62 = vector.broadcast %60 : f32 to vector<2x16x16xf32>
    %63 = arith.mulf %62, %61 : vector<2x16x16xf32>
    %c6_i32_47 = arith.constant 6 : i32
    %64 = arith.addi %10, %c6_i32_47 : i32
    %c1_i32_48 = arith.constant 1 : i32
    %65 = arith.addi %64, %c1_i32_48 : i32
    %66 = arith.index_cast %65 : i32 to index
    %67 = memref.load %arg1[%66] : memref<72xf32, #tpu.memory_space<smem>>
    %c0_49 = arith.constant 0 : index
    %c2_50 = arith.constant 2 : index
    %c1_51 = arith.constant 1 : index
    %68 = vector.load %arg4[%c0_49, %c2_50, %c1_51] : memref<2x18x128xf32, #tpu.memory_space<vmem>>, vector<2x16x16xf32>
    %69 = vector.broadcast %67 : f32 to vector<2x16x16xf32>
    %70 = arith.mulf %69, %68 : vector<2x16x16xf32>
    %71 = arith.addf %63, %70 : vector<2x16x16xf32>
    %c6_i32_52 = arith.constant 6 : i32
    %72 = arith.addi %10, %c6_i32_52 : i32
    %c2_i32_53 = arith.constant 2 : i32
    %73 = arith.addi %72, %c2_i32_53 : i32
    %74 = arith.index_cast %73 : i32 to index
    %75 = memref.load %arg1[%74] : memref<72xf32, #tpu.memory_space<smem>>
    %c0_54 = arith.constant 0 : index
    %c2_55 = arith.constant 2 : index
    %c2_56 = arith.constant 2 : index
    %76 = vector.load %arg4[%c0_54, %c2_55, %c2_56] : memref<2x18x128xf32, #tpu.memory_space<vmem>>, vector<2x16x16xf32>
    %77 = vector.broadcast %75 : f32 to vector<2x16x16xf32>
    %78 = arith.mulf %77, %76 : vector<2x16x16xf32>
    %79 = arith.addf %71, %78 : vector<2x16x16xf32>
    %80 = arith.addf %33, %56 : vector<2x16x16xf32>
    %81 = arith.addf %80, %79 : vector<2x16x16xf32>
    %82 = vector.shape_cast %81 : vector<2x16x16xf32> to vector<2x1x16x16xf32>
    %c0_57 = arith.constant 0 : index
    %c0_58 = arith.constant 0 : index
    %c0_59 = arith.constant 0 : index
    %c0_60 = arith.constant 0 : index
    %83 = vector.load %arg3[%c0_57, %c0_58, %c0_59, %c0_60] : memref<2x2x16x16xf32, #tpu.memory_space<vmem>>, vector<2x1x16x16xf32>
    tpu.vector_store %arg3[%c0_57, %c0_58, %c0_59, %c0_60], %82 {strides = array<i32>} : memref<2x2x16x16xf32, #tpu.memory_space<vmem>>, vector<2x1x16x16xf32>,
    %c9_i32 = arith.constant 9 : i32
    %84 = arith.addi %9, %c9_i32 : i32
    %c0_i32_61 = arith.constant 0 : i32
    %85 = arith.addi %84, %c0_i32_61 : i32
    %c0_i32_62 = arith.constant 0 : i32
    %86 = arith.addi %85, %c0_i32_62 : i32
    %87 = arith.index_cast %86 : i32 to index
    %88 = memref.load %arg1[%87] : memref<72xf32, #tpu.memory_space<smem>>
    %c0_63 = arith.constant 0 : index
    %c0_64 = arith.constant 0 : index
    %c0_65 = arith.constant 0 : index
    %89 = vector.load %arg4[%c0_63, %c0_64, %c0_65] : memref<2x18x128xf32, #tpu.memory_space<vmem>>, vector<2x16x16xf32>
    %90 = vector.broadcast %88 : f32 to vector<2x16x16xf32>
    %91 = arith.mulf %90, %89 : vector<2x16x16xf32>
    %c0_i32_66 = arith.constant 0 : i32
    %92 = arith.addi %84, %c0_i32_66 : i32
    %c1_i32_67 = arith.constant 1 : i32
    %93 = arith.addi %92, %c1_i32_67 : i32
    %94 = arith.index_cast %93 : i32 to index
    %95 = memref.load %arg1[%94] : memref<72xf32, #tpu.memory_space<smem>>
    %c0_68 = arith.constant 0 : index
    %c0_69 = arith.constant 0 : index
    %c1_70 = arith.constant 1 : index
    %96 = vector.load %arg4[%c0_68, %c0_69, %c1_70] : memref<2x18x128xf32, #tpu.memory_space<vmem>>, vector<2x16x16xf32>
    %97 = vector.broadcast %95 : f32 to vector<2x16x16xf32>
    %98 = arith.mulf %97, %96 : vector<2x16x16xf32>
    %99 = arith.addf %91, %98 : vector<2x16x16xf32>
    %c0_i32_71 = arith.constant 0 : i32
    %100 = arith.addi %84, %c0_i32_71 : i32
    %c2_i32_72 = arith.constant 2 : i32
    %101 = arith.addi %100, %c2_i32_72 : i32
    %102 = arith.index_cast %101 : i32 to index
    %103 = memref.load %arg1[%102] : memref<72xf32, #tpu.memory_space<smem>>
    %c0_73 = arith.constant 0 : index
    %c0_74 = arith.constant 0 : index
    %c2_75 = arith.constant 2 : index
    %104 = vector.load %arg4[%c0_73, %c0_74, %c2_75] : memref<2x18x128xf32, #tpu.memory_space<vmem>>, vector<2x16x16xf32>
    %105 = vector.broadcast %103 : f32 to vector<2x16x16xf32>
    %106 = arith.mulf %105, %104 : vector<2x16x16xf32>
    %107 = arith.addf %99, %106 : vector<2x16x16xf32>
    %c3_i32_76 = arith.constant 3 : i32
    %108 = arith.addi %84, %c3_i32_76 : i32
    %c0_i32_77 = arith.constant 0 : i32
    %109 = arith.addi %108, %c0_i32_77 : i32
    %110 = arith.index_cast %109 : i32 to index
    %111 = memref.load %arg1[%110] : memref<72xf32, #tpu.memory_space<smem>>
    %c0_78 = arith.constant 0 : index
    %c1_79 = arith.constant 1 : index
    %c0_80 = arith.constant 0 : index
    %112 = vector.load %arg4[%c0_78, %c1_79, %c0_80] : memref<2x18x128xf32, #tpu.memory_space<vmem>>, vector<2x16x16xf32>
    %113 = vector.broadcast %111 : f32 to vector<2x16x16xf32>
    %114 = arith.mulf %113, %112 : vector<2x16x16xf32>
    %c3_i32_81 = arith.constant 3 : i32
    %115 = arith.addi %84, %c3_i32_81 : i32
    %c1_i32_82 = arith.constant 1 : i32
    %116 = arith.addi %115, %c1_i32_82 : i32
    %117 = arith.index_cast %116 : i32 to index
    %118 = memref.load %arg1[%117] : memref<72xf32, #tpu.memory_space<smem>>
    %c0_83 = arith.constant 0 : index
    %c1_84 = arith.constant 1 : index
    %c1_85 = arith.constant 1 : index
    %119 = vector.load %arg4[%c0_83, %c1_84, %c1_85] : memref<2x18x128xf32, #tpu.memory_space<vmem>>, vector<2x16x16xf32>
    %120 = vector.broadcast %118 : f32 to vector<2x16x16xf32>
    %121 = arith.mulf %120, %119 : vector<2x16x16xf32>
    %122 = arith.addf %114, %121 : vector<2x16x16xf32>
    %c3_i32_86 = arith.constant 3 : i32
    %123 = arith.addi %84, %c3_i32_86 : i32
    %c2_i32_87 = arith.constant 2 : i32
    %124 = arith.addi %123, %c2_i32_87 : i32
    %125 = arith.index_cast %124 : i32 to index
    %126 = memref.load %arg1[%125] : memref<72xf32, #tpu.memory_space<smem>>
    %c0_88 = arith.constant 0 : index
    %c1_89 = arith.constant 1 : index
    %c2_90 = arith.constant 2 : index
    %127 = vector.load %arg4[%c0_88, %c1_89, %c2_90] : memref<2x18x128xf32, #tpu.memory_space<vmem>>, vector<2x16x16xf32>
    %128 = vector.broadcast %126 : f32 to vector<2x16x16xf32>
    %129 = arith.mulf %128, %127 : vector<2x16x16xf32>
    %130 = arith.addf %122, %129 : vector<2x16x16xf32>
    %c6_i32_91 = arith.constant 6 : i32
    %131 = arith.addi %84, %c6_i32_91 : i32
    %c0_i32_92 = arith.constant 0 : i32
    %132 = arith.addi %131, %c0_i32_92 : i32
    %133 = arith.index_cast %132 : i32 to index
    %134 = memref.load %arg1[%133] : memref<72xf32, #tpu.memory_space<smem>>
    %c0_93 = arith.constant 0 : index
    %c2_94 = arith.constant 2 : index
    %c0_95 = arith.constant 0 : index
    %135 = vector.load %arg4[%c0_93, %c2_94, %c0_95] : memref<2x18x128xf32, #tpu.memory_space<vmem>>, vector<2x16x16xf32>
    %136 = vector.broadcast %134 : f32 to vector<2x16x16xf32>
    %137 = arith.mulf %136, %135 : vector<2x16x16xf32>
    %c6_i32_96 = arith.constant 6 : i32
    %138 = arith.addi %84, %c6_i32_96 : i32
    %c1_i32_97 = arith.constant 1 : i32
    %139 = arith.addi %138, %c1_i32_97 : i32
    %140 = arith.index_cast %139 : i32 to index
    %141 = memref.load %arg1[%140] : memref<72xf32, #tpu.memory_space<smem>>
    %c0_98 = arith.constant 0 : index
    %c2_99 = arith.constant 2 : index
    %c1_100 = arith.constant 1 : index
    %142 = vector.load %arg4[%c0_98, %c2_99, %c1_100] : memref<2x18x128xf32, #tpu.memory_space<vmem>>, vector<2x16x16xf32>
    %143 = vector.broadcast %141 : f32 to vector<2x16x16xf32>
    %144 = arith.mulf %143, %142 : vector<2x16x16xf32>
    %145 = arith.addf %137, %144 : vector<2x16x16xf32>
    %c6_i32_101 = arith.constant 6 : i32
    %146 = arith.addi %84, %c6_i32_101 : i32
    %c2_i32_102 = arith.constant 2 : i32
    %147 = arith.addi %146, %c2_i32_102 : i32
    %148 = arith.index_cast %147 : i32 to index
    %149 = memref.load %arg1[%148] : memref<72xf32, #tpu.memory_space<smem>>
    %c0_103 = arith.constant 0 : index
    %c2_104 = arith.constant 2 : index
    %c2_105 = arith.constant 2 : index
    %150 = vector.load %arg4[%c0_103, %c2_104, %c2_105] : memref<2x18x128xf32, #tpu.memory_space<vmem>>, vector<2x16x16xf32>
    %151 = vector.broadcast %149 : f32 to vector<2x16x16xf32>
    %152 = arith.mulf %151, %150 : vector<2x16x16xf32>
    %153 = arith.addf %145, %152 : vector<2x16x16xf32>
    %154 = arith.addf %107, %130 : vector<2x16x16xf32>
    %155 = arith.addf %154, %153 : vector<2x16x16xf32>
    %156 = vector.shape_cast %155 : vector<2x16x16xf32> to vector<2x1x16x16xf32>
    %c0_106 = arith.constant 0 : index
    %c1_107 = arith.constant 1 : index
    %c0_108 = arith.constant 0 : index
    %c0_109 = arith.constant 0 : index
    %157 = vector.load %arg3[%c0_106, %c1_107, %c0_108, %c0_109] : memref<2x2x16x16xf32, #tpu.memory_space<vmem>>, vector<2x1x16x16xf32>
    tpu.vector_store %arg3[%c0_106, %c1_107, %c0_108, %c0_109], %156 {strides = array<i32>} : memref<2x2x16x16xf32, #tpu.memory_space<vmem>>, vector<2x1x16x16xf32>,
    return
  }
  func.func @transform_0(%arg0: i32, %arg1: memref<72xf32, #tpu.memory_space<smem>>) -> (i32, i32, i32, i32) {
    %c0_i32 = arith.constant 0 : i32
    %c0_i32_0 = arith.constant 0 : i32
    %c0_i32_1 = arith.constant 0 : i32
    %c0_i32_2 = arith.constant 0 : i32
    return %c0_i32, %arg0, %c0_i32_0, %c0_i32_1 : i32, i32, i32, i32
  }
  func.func @transform_1(%arg0: i32, %arg1: memref<72xf32, #tpu.memory_space<smem>>) -> (i32, i32, i32, i32) {
    %c0_i32 = arith.constant 0 : i32
    %c0_i32_0 = arith.constant 0 : i32
    %c0_i32_1 = arith.constant 0 : i32
    %c0_i32_2 = arith.constant 0 : i32
    return %c0_i32, %arg0, %c0_i32_0, %c0_i32_1 : i32, i32, i32, i32
  }
}

</mosaic_0001>

<llo_original>
// kernel: tpu_custom_call.1
$region0: #{tpu_custom_call.1}
  #allocation0 [shape = 'u32[]', space=smem, size = 0x4, offset = 0x4, fixed_abs, tag = 'smem constant byte address 0x4 - core index']
  #allocation1 [shape = 'u32[144,128]{1,0:T(1,128)}', space=vmem, size = 0x12000, scoped, tag = 'internal scratch']
  #allocation2 [shape = 'f32[2,18,128]{2,1,0:T(8,128)}', space=vmem, size = 0x6000, scoped, tag = 'scratch operand']
  #allocation3 [shape = 's32[1]{0}', space=sflag, size = 0x4, scoped, tag = 'scoped memory for tpu_custom_call.1']
  #allocation4 [shape = 'u8[512]{0}', space=smem, size = 0x200, scoped, tag = 'prefetched SMEM operand 0']
  #allocation9 [shape = 's32[]', space=sflag, size = 0x4, offset = 0, fixed_abs, tag = 'sflag constant byte address 0x0 - dummy sync flag']
  #allocation11 [shape = 's32[]', space=sflag, size = 0x4, offset = 0, fixed_abs, tag = 'sflag constant byte address 0x0 - dummy sync flag']
  %s0 = inlined_call_operand.hbm [shape: f32[72], index: 0, kind: input, shape index: {}]
  %s1 = inlined_call_operand.hbm [shape: f32[2,4,16,16], index: 1, kind: input, shape index: {}]
  %s2 = inlined_call_operand.hbm [shape: f32[2,8,16,16], index: 2, kind: output, shape index: {}]
  %s3 = sld [smem:[#allocation0]]
  $region41: #{tpu_custom_call.1} parent=0
    _
  %s5 = ssub.s32 1, %s3
  %s6 = scalar_select 0, %s5, %s3
  %8 = dma.hbm_to_smem %s0, 16, [#allocation4], [#allocation3]
  %9 = dma.done [#allocation3], 16
  %10 = sfence
  $region1: #{tpu_custom_call.1} parent=0
    #allocation5 [shape = 'u8[32768]{0}', space=vmem, size = 0x8000, scoped, tag = 'input window, operand 1']
    #allocation6 [shape = 's32[2]{0}', space=sflag, size = 0x8, scoped, tag = 'scoped memory for tpu_custom_call.1']
    #allocation7 [shape = 's32[2]{0}', space=sflag, size = 0x8, scoped, tag = 'scoped memory for tpu_custom_call.1']
    #allocation8 [shape = 'u8[65536]{0}', space=vmem, size = 0x10000, scoped, tag = 'output window, operand 0']
    %11 = vsyncpa [#allocation6], 0
    %s12 = scalar_lea.sflag [#allocation6], 1
    %13 = vsyncpa %s12, 0
    %14 = vsyncpa [#allocation7], 0
    %s15 = scalar_lea.sflag [#allocation7], 1
    %16 = vsyncpa %s15, 0
    loop: start=0, step=1, limit=6
    $region2: #{tpu_custom_call.1} parent=1 // loop_pre_header
      _
    $region3: #{tpu_custom_call.1} parent=1 // loop_header
      %s18 = sphi 0, %s22
      %p19 = scmp.ge.s32.totalorder %s18, 6
      %s28 = sphi 0, %s30
      %s31 = sphi 0, %s28
      %s32 = sphi 0, %s31
      %s48 = sphi 0, %s32
      %s54 = sphi 0, %s56
      %s57 = sphi 0, %s54
      %s58 = sphi 0, %s57
      %s74 = sphi 0, %s58
    $region4: #{tpu_custom_call.1} parent=1 // loop_header_branch
      %21 = sbr.rel (%p19) target = $region8
    $region5: #{tpu_custom_call.1} parent=1 // loop_body
      %s23 = ssub.s32 %s18, 1
      %s24 = ssub.s32 %s18, 2
      %s25 = sadd.s32 %s18, 1
      %s26 = ssub.s32 %s18, %s25
      %p27 = scmp.eq.s32.totalorder %s26, 0
      %s29 = sadd.s32 %s28, 1
      %s30 = scalar_select %p27, %s28, %s29
      %p33 = pneg %p27
      %p34 = scmp.eq.s32.totalorder %s18, 3
      %p35 = por %p33, %p34
      %p36 = scmp.ne.s32.totalorder %s28, %s31
      %p37 = scmp.eq.s32.totalorder %s18, 0
      %p38 = por %p36, %p37
      %p39 = scmp.ne.s32.totalorder %s28, %s31
      %p40 = scmp.eq.s32.totalorder %s23, 3
      %p41 = por %p39, %p40
      %p42 = scmp.ne.s32.totalorder %s31, %s32
      %p43 = scmp.eq.s32.totalorder %s23, 0
      %p44 = por %p42, %p43
      %p45 = scmp.ne.s32.totalorder %s31, %s32
      %p46 = scmp.eq.s32.totalorder %s24, 3
      %p47 = por %p45, %p46
      %p49 = scmp.ne.s32.totalorder %s32, %s48
      %p50 = scmp.eq.s32.totalorder %s24, 0
      %p51 = por %p49, %p50
      %s52 = ssub.s32 %s18, %s25
      %p53 = scmp.eq.s32.totalorder %s52, 0
      %s55 = sadd.s32 %s54, 1
      %s56 = scalar_select %p53, %s54, %s55
      %p59 = pneg %p53
      %p60 = scmp.eq.s32.totalorder %s18, 3
      %p61 = por %p59, %p60
      %p62 = scmp.ne.s32.totalorder %s54, %s57
      %p63 = scmp.eq.s32.totalorder %s18, 0
      %p64 = por %p62, %p63
      %p65 = scmp.ne.s32.totalorder %s54, %s57
      %p66 = scmp.eq.s32.totalorder %s23, 3
      %p67 = por %p65, %p66
      %p68 = scmp.ne.s32.totalorder %s57, %s58
      %p69 = scmp.eq.s32.totalorder %s23, 0
      %p70 = por %p68, %p69
      %p71 = scmp.ne.s32.totalorder %s57, %s58
      %p72 = scmp.eq.s32.totalorder %s24, 3
      %p73 = por %p71, %p72
      %p75 = scmp.ne.s32.totalorder %s58, %s74
      %p76 = scmp.eq.s32.totalorder %s24, 0
      %p77 = por %p75, %p76
      %p78 = scmp.le.s32.totalorder 1, %s18
      %p79 = scmp.lt.s32.totalorder %s18, 5
      %p80 = pnand %p78, %p79
      %p81 = pneg %p80
      // Predicated region
      $region9: #{tpu_custom_call.1} parent=5 // pred_check
        _
      $region10: #{tpu_custom_call.1} parent=5 // pred_check_branch
        %83 = sbr.rel (%p80) target = $region12
      $region11: #{tpu_custom_call.1} parent=5 // pred_region
        %s84 = ssub.s32 %s18, 1
      $region12: #{tpu_custom_call.1} parent=5 // pred_fallthru
        _
      %p85 = scmp.lt.s32.totalorder %s18, 4
      // Predicated region
      $region13: #{tpu_custom_call.1} parent=5 // pred_check
        %p86 = pneg %p85
      $region14: #{tpu_custom_call.1} parent=5 // pred_check_branch
        %88 = sbr.rel (%p86) target = $region16
      $region15: #{tpu_custom_call.1} parent=5 // pred_region
        // Predicated region
        $region17: #{tpu_custom_call.1} parent=15 // pred_check
          %p89 = pneg %p38
        $region18: #{tpu_custom_call.1} parent=15 // pred_check_branch
          %91 = sbr.rel (%p89) target = $region20
        $region19: #{tpu_custom_call.1} parent=15 // pred_region
          #allocation10 [shape = 'u32[6]{0}', space=smem, size = 0x18, scoped, tag = 'DMA stride descriptor']
          %s92 = sand.u32 %s28, 1
          %s93 = scalar_lea.sflag [#allocation6], %s92
          %s94 = sand.u32 %s28, 1
          %s95 = smul.addr %s94, 32
          %s96 = scalar_lea.vmem [#allocation5], %s95
          %s98 = ssub.s32 512, 512
          %99 = vsyncadd %s93, %s98
          %s100 = smul.addr %s18, 2
          %s101 = smul.addr %s100, 128
          %s102 = scalar_lea.hbm %s1, %s101
          %s104 = sshll.u32 1, 14
          %s105 = sxor.u32 4294967295, %s104
          %s107 = sld [smem:[#allocation0]]
          %s108 = sadd.s32 2, %s107
          %s110 = sshll.u32 7, 26
          %s111 = sxor.u32 4294967295, %s110
          %s112 = sand.u32 0, %s111
          %s113 = sshll.u32 %s108, 26
          %s114 = sor.u32 %s112, %s113
          %s115 = sshll.u32 %s96, 4
          %s116 = int_to_ptr.vmem [resolvable:$true] %s115
          %122 = sst [smem:[#allocation10]] 1024
          %s123 = scalar_lea.smem [#allocation10], 1
          %124 = sst [smem:[%s123]] 256
          %s125 = scalar_lea.smem [#allocation10], 2
          %126 = sst [smem:[%s125]] 2
          %s127 = scalar_lea.smem [#allocation10], 3
          %128 = sst [smem:[%s127]] 128
          %s129 = scalar_lea.smem [#allocation10], 4
          %130 = sst [smem:[%s129]] 128
          %s131 = scalar_lea.smem [#allocation10], 5
          %132 = sst [smem:[%s131]] 8
          %134 = dma.general %s102, 512, %s116, %s93, [#allocation9], [#allocation10], %s114, 0
        $region20: #{tpu_custom_call.1} parent=15 // pred_fallthru
          _
      $region16: #{tpu_custom_call.1} parent=5 // pred_fallthru
        _
      %p135 = scmp.le.s32.totalorder 1, %s18
      %p136 = scmp.lt.s32.totalorder %s18, 5
      %p137 = pnand %p135, %p136
      %p138 = pneg %p137
      // Predicated region
      $region21: #{tpu_custom_call.1} parent=5 // pred_check
        _
      $region22: #{tpu_custom_call.1} parent=5 // pred_check_branch
        %140 = sbr.rel (%p137) target = $region24
      $region23: #{tpu_custom_call.1} parent=5 // pred_region
        %s141 = ssub.s32 %s18, 1
        %s142 = sand.u32 %s31, 1
        %s143 = scalar_lea.sflag [#allocation6], %s142
        %s144 = sand.u32 %s31, 1
        %s145 = smul.addr %s144, 32
        %s146 = scalar_lea.vmem [#allocation5], %s145
        // Predicated region
        $region25: #{tpu_custom_call.1} parent=23 // pred_check
          %p147 = pneg %p44
        $region26: #{tpu_custom_call.1} parent=23 // pred_check_branch
          %149 = sbr.rel (%p147) target = $region28
        $region27: #{tpu_custom_call.1} parent=23 // pred_region
          %150 = dma.done %s143, 512
        $region28: #{tpu_custom_call.1} parent=23 // pred_fallthru
          _
        %s151 = sand.u32 %s31, 1
        %s152 = scalar_lea.sflag [#allocation6], %s151
        %s153 = sand.u32 %s31, 1
        %s154 = smul.addr %s153, 32
        %s155 = scalar_lea.vmem [#allocation5], %s154
        %p156 = pneg %p44
        %p157 = pneg %p41
        %p158 = pneg %p70
        %p159 = pneg %p67
        %s160 = sand.u32 %s57, 1
        %s161 = scalar_lea.sflag [#allocation7], %s160
        %s162 = sand.u32 %s57, 1
        %s163 = smul.addr %s162, 64
        %s164 = scalar_lea.vmem [#allocation8], %s163
        %s165 = smul.u32 2, %s23
        %vm166 = vcmask 139264
        %167 = vst.msk [vmem:[#allocation2] sm:$0x1] %vm166, 0.0
        %168 = vst.msk [vmem:[#allocation2 + $0x18] sm:$0x1] %vm166, 0.0
        %169 = vst.msk [vmem:[#allocation2 + $0x11] sm:$0x1] %vm166, 0.0
        %170 = vst.msk [vmem:[#allocation2 + $0x29] sm:$0x1] %vm166, 0.0
        %vm171 = vcmask 7168
        %172 = vst.msk [vmem:[#allocation2 + $0x1] sm:$0xff] %vm171, 0.0
        %173 = vst.msk [vmem:[#allocation2 + $0x9] sm:$0xff] %vm171, 0.0
        %174 = vst.msk [vmem:[#allocation2 + $0x19] sm:$0xff] %vm171, 0.0
        %175 = vst.msk [vmem:[#allocation2 + $0x21] sm:$0xff] %vm171, 0.0
        %vm176 = vcmask 146568
        %177 = vst.msk [vmem:[#allocation2 + $0x1] sm:$0xff] %vm176, 0.0
        %178 = vst.msk [vmem:[#allocation2 + $0x9] sm:$0xff] %vm176, 0.0
        %179 = vst.msk [vmem:[#allocation2 + $0x19] sm:$0xff] %vm176, 0.0
        %180 = vst.msk [vmem:[#allocation2 + $0x21] sm:$0xff] %vm176, 0.0
        %v181 = vld [vmem:[%s146] sm:$0xff]
        %v182 = vld [vmem:[%s146 + $0x8] sm:$0xff]
        %v183 = vld [vmem:[%s146 + $0x10] sm:$0xff]
        %v184 = vld [vmem:[%s146 + $0x18] sm:$0xff]
        %189 = vrot.lane.b32.xlu0 %v181, 1
        %v190 = vpop.permute.xlu0 %189
        %191 = vrot.lane.b32.xlu0 %v182, 1
        %v192 = vpop.permute.xlu0 %191
        %193 = vrot.lane.b32.xlu0 %v183, 1
        %v194 = vpop.permute.xlu0 %193
        %195 = vrot.lane.b32.xlu0 %v184, 1
        %v196 = vpop.permute.xlu0 %195
        %vm201 = vcmask 138248
        %202 = vst.msk [vmem:[#allocation2 + $0x1] sm:$0xff] %vm201, %v190
        %203 = vst.msk [vmem:[#allocation2 + $0x9] sm:$0xff] %vm201, %v192
        %204 = vst.msk [vmem:[#allocation2 + $0x19] sm:$0xff] %vm201, %v194
        %205 = vst.msk [vmem:[#allocation2 + $0x21] sm:$0xff] %vm201, %v196
        %s206 = smul.u32 %s23, 18
        %s207 = sld [smem:[#allocation4 + %s206]]
        %v208 = vld [vmem:[#allocation2] sm:$0xff]
        %v209 = vld [vmem:[#allocation2 + $0x8] sm:$0xff]
        %v210 = vld [vmem:[#allocation2 + $0x18] sm:$0xff]
        %v211 = vld [vmem:[#allocation2 + $0x20] sm:$0xff]
        %v212 = vstv %s207
        %v213 = vmul.f32 %v212, %v208
        %v214 = vmul.f32 %v212, %v209
        %v215 = vmul.f32 %v212, %v210
        %v216 = vmul.f32 %v212, %v211
        %s217 = sadd.s32 %s206, 1
        %s218 = sld [smem:[#allocation4 + %s217]]
        %v219 = vstv %s218
        %v220 = vmul.f32 %v219, %v208
        %v221 = vmul.f32 %v219, %v209
        %v222 = vmul.f32 %v219, %v210
        %v223 = vmul.f32 %v219, %v211
        %228 = vrot.lane.b32.xlu0 %v220, 127
        %v229 = vpop.permute.xlu0 %228
        %230 = vrot.lane.b32.xlu0 %v221, 127
        %v231 = vpop.permute.xlu0 %230
        %232 = vrot.lane.b32.xlu0 %v222, 127
        %v233 = vpop.permute.xlu0 %232
        %234 = vrot.lane.b32.xlu0 %v223, 127
        %v235 = vpop.permute.xlu0 %234
        %v240 = vadd.f32 %v213, %v229
        %v241 = vadd.f32 %v214, %v231
        %v242 = vadd.f32 %v215, %v233
        %v243 = vadd.f32 %v216, %v235
        %s244 = sadd.s32 %s206, 2
        %s245 = sld [smem:[#allocation4 + %s244]]
        %v246 = vstv %s245
        %v247 = vmul.f32 %v246, %v208
        %v248 = vmul.f32 %v246, %v209
        %v249 = vmul.f32 %v246, %v210
        %v250 = vmul.f32 %v246, %v211
        %255 = vrot.lane.b32.xlu0 %v247, 126
        %v256 = vpop.permute.xlu0 %255
        %257 = vrot.lane.b32.xlu0 %v248, 126
        %v258 = vpop.permute.xlu0 %257
        %259 = vrot.lane.b32.xlu0 %v249, 126
        %v260 = vpop.permute.xlu0 %259
        %261 = vrot.lane.b32.xlu0 %v250, 126
        %v262 = vpop.permute.xlu0 %261
        %v267 = vadd.f32 %v240, %v256
        %v268 = vadd.f32 %v241, %v258
        %v269 = vadd.f32 %v242, %v260
        %v270 = vadd.f32 %v243, %v262
        %s271 = sadd.s32 %s206, 3
        %s272 = sld [smem:[#allocation4 + %s271]]
        %v273 = vld [vmem:[#allocation2 + $0x1] sm:$0xff]
        %v274 = vld [vmem:[#allocation2 + $0x9] sm:$0xff]
        %v275 = vld [vmem:[#allocation2 + $0x19] sm:$0xff]
        %v276 = vld [vmem:[#allocation2 + $0x21] sm:$0xff]
        %v277 = vstv %s272
        %v278 = vmul.f32 %v277, %v273
        %v279 = vmul.f32 %v277, %v274
        %v280 = vmul.f32 %v277, %v275
        %v281 = vmul.f32 %v277, %v276
        %s282 = sadd.s32 %s206, 4
        %s283 = sld [smem:[#allocation4 + %s282]]
        %v284 = vstv %s283
        %v285 = vmul.f32 %v284, %v273
        %v286 = vmul.f32 %v284, %v274
        %v287 = vmul.f32 %v284, %v275
        %v288 = vmul.f32 %v284, %v276
        %293 = vrot.lane.b32.xlu0 %v285, 127
        %v294 = vpop.permute.xlu0 %293
        %295 = vrot.lane.b32.xlu0 %v286, 127
        %v296 = vpop.permute.xlu0 %295
        %297 = vrot.lane.b32.xlu0 %v287, 127
        %v298 = vpop.permute.xlu0 %297
        %299 = vrot.lane.b32.xlu0 %v288, 127
        %v300 = vpop.permute.xlu0 %299
        %v305 = vadd.f32 %v278, %v294
        %v306 = vadd.f32 %v279, %v296
        %v307 = vadd.f32 %v280, %v298
        %v308 = vadd.f32 %v281, %v300
        %s309 = sadd.s32 %s206, 5
        %s310 = sld [smem:[#allocation4 + %s309]]
        %v311 = vstv %s310
        %v312 = vmul.f32 %v311, %v273
        %v313 = vmul.f32 %v311, %v274
        %v314 = vmul.f32 %v311, %v275
        %v315 = vmul.f32 %v311, %v276
        %320 = vrot.lane.b32.xlu0 %v312, 126
        %v321 = vpop.permute.xlu0 %320
        %322 = vrot.lane.b32.xlu0 %v313, 126
        %v323 = vpop.permute.xlu0 %322
        %324 = vrot.lane.b32.xlu0 %v314, 126
        %v325 = vpop.permute.xlu0 %324
        %326 = vrot.lane.b32.xlu0 %v315, 126
        %v327 = vpop.permute.xlu0 %326
        %v332 = vadd.f32 %v305, %v321
        %v333 = vadd.f32 %v306, %v323
        %v334 = vadd.f32 %v307, %v325
        %v335 = vadd.f32 %v308, %v327
        %s336 = sadd.s32 %s206, 6
        %s337 = sld [smem:[#allocation4 + %s336]]
        %v338 = vld [vmem:[#allocation2 + $0x2] sm:$0xff]
        %v339 = vld [vmem:[#allocation2 + $0xa] sm:$0xff]
        %v340 = vld [vmem:[#allocation2 + $0x1a] sm:$0xff]
        %v341 = vld [vmem:[#allocation2 + $0x22] sm:$0xff]
        %v342 = vstv %s337
        %v343 = vmul.f32 %v342, %v338
        %v344 = vmul.f32 %v342, %v339
        %v345 = vmul.f32 %v342, %v340
        %v346 = vmul.f32 %v342, %v341
        %s347 = sadd.s32 %s206, 7
        %s348 = sld [smem:[#allocation4 + %s347]]
        %v349 = vstv %s348
        %v350 = vmul.f32 %v349, %v338
        %v351 = vmul.f32 %v349, %v339
        %v352 = vmul.f32 %v349, %v340
        %v353 = vmul.f32 %v349, %v341
        %358 = vrot.lane.b32.xlu0 %v350, 127
        %v359 = vpop.permute.xlu0 %358
        %360 = vrot.lane.b32.xlu0 %v351, 127
        %v361 = vpop.permute.xlu0 %360
        %362 = vrot.lane.b32.xlu0 %v352, 127
        %v363 = vpop.permute.xlu0 %362
        %364 = vrot.lane.b32.xlu0 %v353, 127
        %v365 = vpop.permute.xlu0 %364
        %v370 = vadd.f32 %v343, %v359
        %v371 = vadd.f32 %v344, %v361
        %v372 = vadd.f32 %v345, %v363
        %v373 = vadd.f32 %v346, %v365
        %s374 = sadd.s32 %s206, 8
        %s375 = sld [smem:[#allocation4 + %s374]]
        %v376 = vstv %s375
        %v377 = vmul.f32 %v376, %v338
        %v378 = vmul.f32 %v376, %v339
        %v379 = vmul.f32 %v376, %v340
        %v380 = vmul.f32 %v376, %v341
        %385 = vrot.lane.b32.xlu0 %v377, 126
        %v386 = vpop.permute.xlu0 %385
        %387 = vrot.lane.b32.xlu0 %v378, 126
        %v388 = vpop.permute.xlu0 %387
        %389 = vrot.lane.b32.xlu0 %v379, 126
        %v390 = vpop.permute.xlu0 %389
        %391 = vrot.lane.b32.xlu0 %v380, 126
        %v392 = vpop.permute.xlu0 %391
        %v397 = vadd.f32 %v370, %v386
        %v398 = vadd.f32 %v371, %v388
        %v399 = vadd.f32 %v372, %v390
        %v400 = vadd.f32 %v373, %v392
        %v401 = vadd.f32 %v267, %v332
        %v402 = vadd.f32 %v268, %v333
        %v403 = vadd.f32 %v269, %v334
        %v404 = vadd.f32 %v270, %v335
        %v405 = vadd.f32 %v401, %v397
        %v406 = vadd.f32 %v402, %v398
        %v407 = vadd.f32 %v403, %v399
        %v408 = vadd.f32 %v404, %v400
        %vm409 = vcmask 130048
        %410 = vst.msk [vmem:[%s164] sm:$0xff] %vm409, %v405
        %411 = vst.msk [vmem:[%s164 + $0x8] sm:$0xff] %vm409, %v406
        %412 = vst.msk [vmem:[%s164 + $0x20] sm:$0xff] %vm409, %v407
        %413 = vst.msk [vmem:[%s164 + $0x28] sm:$0xff] %vm409, %v408
        %s414 = sadd.s32 %s206, 9
        %s415 = sld [smem:[#allocation4 + %s414]]
        %v416 = vld [vmem:[#allocation2] sm:$0xff]
        %v417 = vld [vmem:[#allocation2 + $0x8] sm:$0xff]
        %v418 = vld [vmem:[#allocation2 + $0x18] sm:$0xff]
        %v419 = vld [vmem:[#allocation2 + $0x20] sm:$0xff]
        %v420 = vstv %s415
        %v421 = vmul.f32 %v420, %v416
        %v422 = vmul.f32 %v420, %v417
        %v423 = vmul.f32 %v420, %v418
        %v424 = vmul.f32 %v420, %v419
        %s425 = sadd.s32 %s206, 10
        %s426 = sld [smem:[#allocation4 + %s425]]
        %v427 = vstv %s426
        %v428 = vmul.f32 %v427, %v416
        %v429 = vmul.f32 %v427, %v417
        %v430 = vmul.f32 %v427, %v418
        %v431 = vmul.f32 %v427, %v419
        %436 = vrot.lane.b32.xlu0 %v428, 127
        %v437 = vpop.permute.xlu0 %436
        %438 = vrot.lane.b32.xlu0 %v429, 127
        %v439 = vpop.permute.xlu0 %438
        %440 = vrot.lane.b32.xlu0 %v430, 127
        %v441 = vpop.permute.xlu0 %440
        %442 = vrot.lane.b32.xlu0 %v431, 127
        %v443 = vpop.permute.xlu0 %442
        %v448 = vadd.f32 %v421, %v437
        %v449 = vadd.f32 %v422, %v439
        %v450 = vadd.f32 %v423, %v441
        %v451 = vadd.f32 %v424, %v443
        %s452 = sadd.s32 %s206, 11
        %s453 = sld [smem:[#allocation4 + %s452]]
        %v454 = vstv %s453
        %v455 = vmul.f32 %v454, %v416
        %v456 = vmul.f32 %v454, %v417
        %v457 = vmul.f32 %v454, %v418
        %v458 = vmul.f32 %v454, %v419
        %463 = vrot.lane.b32.xlu0 %v455, 126
        %v464 = vpop.permute.xlu0 %463
        %465 = vrot.lane.b32.xlu0 %v456, 126
        %v466 = vpop.permute.xlu0 %465
        %467 = vrot.lane.b32.xlu0 %v457, 126
        %v468 = vpop.permute.xlu0 %467
        %469 = vrot.lane.b32.xlu0 %v458, 126
        %v470 = vpop.permute.xlu0 %469
        %v475 = vadd.f32 %v448, %v464
        %v476 = vadd.f32 %v449, %v466
        %v477 = vadd.f32 %v450, %v468
        %v478 = vadd.f32 %v451, %v470
        %s479 = sadd.s32 %s206, 12
        %s480 = sld [smem:[#allocation4 + %s479]]
        %v481 = vld [vmem:[#allocation2 + $0x1] sm:$0xff]
        %v482 = vld [vmem:[#allocation2 + $0x9] sm:$0xff]
        %v483 = vld [vmem:[#allocation2 + $0x19] sm:$0xff]
        %v484 = vld [vmem:[#allocation2 + $0x21] sm:$0xff]
        %v485 = vstv %s480
        %v486 = vmul.f32 %v485, %v481
        %v487 = vmul.f32 %v485, %v482
        %v488 = vmul.f32 %v485, %v483
        %v489 = vmul.f32 %v485, %v484
        %s490 = sadd.s32 %s206, 13
        %s491 = sld [smem:[#allocation4 + %s490]]
        %v492 = vstv %s491
        %v493 = vmul.f32 %v492, %v481
        %v494 = vmul.f32 %v492, %v482
        %v495 = vmul.f32 %v492, %v483
        %v496 = vmul.f32 %v492, %v484
        %501 = vrot.lane.b32.xlu0 %v493, 127
        %v502 = vpop.permute.xlu0 %501
        %503 = vrot.lane.b32.xlu0 %v494, 127
        %v504 = vpop.permute.xlu0 %503
        %505 = vrot.lane.b32.xlu0 %v495, 127
        %v506 = vpop.permute.xlu0 %505
        %507 = vrot.lane.b32.xlu0 %v496, 127
        %v508 = vpop.permute.xlu0 %507
        %v513 = vadd.f32 %v486, %v502
        %v514 = vadd.f32 %v487, %v504
        %v515 = vadd.f32 %v488, %v506
        %v516 = vadd.f32 %v489, %v508
        %s517 = sadd.s32 %s206, 14
        %s518 = sld [smem:[#allocation4 + %s517]]
        %v519 = vstv %s518
        %v520 = vmul.f32 %v519, %v481
        %v521 = vmul.f32 %v519, %v482
        %v522 = vmul.f32 %v519, %v483
        %v523 = vmul.f32 %v519, %v484
        %528 = vrot.lane.b32.xlu0 %v520, 126
        %v529 = vpop.permute.xlu0 %528
        %530 = vrot.lane.b32.xlu0 %v521, 126
        %v531 = vpop.permute.xlu0 %530
        %532 = vrot.lane.b32.xlu0 %v522, 126
        %v533 = vpop.permute.xlu0 %532
        %534 = vrot.lane.b32.xlu0 %v523, 126
        %v535 = vpop.permute.xlu0 %534
        %v540 = vadd.f32 %v513, %v529
        %v541 = vadd.f32 %v514, %v531
        %v542 = vadd.f32 %v515, %v533
        %v543 = vadd.f32 %v516, %v535
        %s544 = sadd.s32 %s206, 15
        %s545 = sld [smem:[#allocation4 + %s544]]
        %v546 = vld [vmem:[#allocation2 + $0x2] sm:$0xff]
        %v547 = vld [vmem:[#allocation2 + $0xa] sm:$0xff]
        %v548 = vld [vmem:[#allocation2 + $0x1a] sm:$0xff]
        %v549 = vld [vmem:[#allocation2 + $0x22] sm:$0xff]
        %v550 = vstv %s545
        %v551 = vmul.f32 %v550, %v546
        %v552 = vmul.f32 %v550, %v547
        %v553 = vmul.f32 %v550, %v548
        %v554 = vmul.f32 %v550, %v549
        %s555 = sadd.s32 %s206, 16
        %s556 = sld [smem:[#allocation4 + %s555]]
        %v557 = vstv %s556
        %v558 = vmul.f32 %v557, %v546
        %v559 = vmul.f32 %v557, %v547
        %v560 = vmul.f32 %v557, %v548
        %v561 = vmul.f32 %v557, %v549
        %566 = vrot.lane.b32.xlu0 %v558, 127
        %v567 = vpop.permute.xlu0 %566
        %568 = vrot.lane.b32.xlu0 %v559, 127
        %v569 = vpop.permute.xlu0 %568
        %570 = vrot.lane.b32.xlu0 %v560, 127
        %v571 = vpop.permute.xlu0 %570
        %572 = vrot.lane.b32.xlu0 %v561, 127
        %v573 = vpop.permute.xlu0 %572
        %v578 = vadd.f32 %v551, %v567
        %v579 = vadd.f32 %v552, %v569
        %v580 = vadd.f32 %v553, %v571
        %v581 = vadd.f32 %v554, %v573
        %s582 = sadd.s32 %s206, 17
        %s583 = sld [smem:[#allocation4 + %s582]]
        %v584 = vstv %s583
        %v585 = vmul.f32 %v584, %v546
        %v586 = vmul.f32 %v584, %v547
        %v587 = vmul.f32 %v584, %v548
        %v588 = vmul.f32 %v584, %v549
        %593 = vrot.lane.b32.xlu0 %v585, 126
        %v594 = vpop.permute.xlu0 %593
        %595 = vrot.lane.b32.xlu0 %v586, 126
        %v596 = vpop.permute.xlu0 %595
        %597 = vrot.lane.b32.xlu0 %v587, 126
        %v598 = vpop.permute.xlu0 %597
        %599 = vrot.lane.b32.xlu0 %v588, 126
        %v600 = vpop.permute.xlu0 %599
        %v605 = vadd.f32 %v578, %v594
        %v606 = vadd.f32 %v579, %v596
        %v607 = vadd.f32 %v580, %v598
        %v608 = vadd.f32 %v581, %v600
        %v609 = vadd.f32 %v475, %v540
        %v610 = vadd.f32 %v476, %v541
        %v611 = vadd.f32 %v477, %v542
        %v612 = vadd.f32 %v478, %v543
        %v613 = vadd.f32 %v609, %v605
        %v614 = vadd.f32 %v610, %v606
        %v615 = vadd.f32 %v611, %v607
        %v616 = vadd.f32 %v612, %v608
        %s617 = scalar_lea.vmem %s164, 16 [#allocation8]
        %618 = vst.msk [vmem:[%s617] sm:$0xff] %vm409, %v613
        %619 = vst.msk [vmem:[%s617 + $0x8] sm:$0xff] %vm409, %v614
        %620 = vst.msk [vmem:[%s617 + $0x20] sm:$0xff] %vm409, %v615
        %621 = vst.msk [vmem:[%s617 + $0x28] sm:$0xff] %vm409, %v616
        %s622 = sand.u32 %s57, 1
        %s623 = scalar_lea.sflag [#allocation7], %s622
        %s624 = sand.u32 %s57, 1
        %s625 = smul.addr %s624, 64
        %s626 = scalar_lea.vmem [#allocation8], %s625
        // Predicated region
        $region29: #{tpu_custom_call.1} parent=23 // pred_check
          %p627 = pneg %p67
        $region30: #{tpu_custom_call.1} parent=23 // pred_check_branch
          %629 = sbr.rel (%p627) target = $region32
        $region31: #{tpu_custom_call.1} parent=23 // pred_region
          #allocation12 [shape = 'u32[6]{0}', space=smem, size = 0x18, scoped, tag = 'DMA stride descriptor']
          %s630 = smul.u32 2, %s23
          %s632 = ssub.s32 1024, 1024
          %633 = vsyncadd %s623, %s632
          %s634 = smul.addr %s630, 2
          %s635 = smul.addr %s634, 128
          %s636 = scalar_lea.hbm %s2, %s635
          %s638 = sshll.u32 1, 14
          %s639 = sxor.u32 4294967295, %s638
          %s642 = sshll.u32 7, 18
          %s643 = sxor.u32 4294967295, %s642
          %s644 = sand.u32 0, %s643
          %s646 = sor.u32 %s644, 0
          %s648 = sshll.u32 3, 24
          %s649 = sxor.u32 4294967295, %s648
          %s650 = sand.u32 %s646, %s649
          %s652 = sor.u32 %s650, 0
          %s653 = sshll.u32 %s626, 4
          %s654 = int_to_ptr.vmem [resolvable:$true] %s653
          %660 = sst [smem:[#allocation12]] 512
          %s661 = scalar_lea.smem [#allocation12], 1
          %662 = sst [smem:[%s661]] 2048
          %s663 = scalar_lea.smem [#allocation12], 2
          %664 = sst [smem:[%s663]] 4
          %s665 = scalar_lea.smem [#allocation12], 3
          %666 = sst [smem:[%s665]] 128
          %s667 = scalar_lea.smem [#allocation12], 4
          %668 = sst [smem:[%s667]] 128
          %s669 = scalar_lea.smem [#allocation12], 5
          %670 = sst [smem:[%s669]] 8
          %672 = dma.general %s654, 1024, %s636, %s623, [#allocation11], [#allocation12], %s652, 0
        $region32: #{tpu_custom_call.1} parent=23 // pred_fallthru
          _
      $region24: #{tpu_custom_call.1} parent=5 // pred_fallthru
        _
      %p673 = scmp.le.s32.totalorder 2, %s18
      // Predicated region
      $region33: #{tpu_custom_call.1} parent=5 // pred_check
        %p674 = pneg %p673
      $region34: #{tpu_custom_call.1} parent=5 // pred_check_branch
        %676 = sbr.rel (%p674) target = $region36
      $region35: #{tpu_custom_call.1} parent=5 // pred_region
        %s677 = ssub.s32 %s18, 2
        // Predicated region
        $region37: #{tpu_custom_call.1} parent=35 // pred_check
          %p678 = pneg %p73
        $region38: #{tpu_custom_call.1} parent=35 // pred_check_branch
          %680 = sbr.rel (%p678) target = $region40
        $region39: #{tpu_custom_call.1} parent=35 // pred_region
          %s681 = sand.u32 %s58, 1
          %s682 = scalar_lea.sflag [#allocation7], %s681
          %s683 = sand.u32 %s58, 1
          %s684 = smul.addr %s683, 64
          %s685 = scalar_lea.vmem [#allocation8], %s684
          %686 = dma.done %s682, 1024
        $region40: #{tpu_custom_call.1} parent=35 // pred_fallthru
          _
      $region36: #{tpu_custom_call.1} parent=5 // pred_fallthru
        _
    $region6: #{tpu_custom_call.1} parent=1 // loop_footer
      %s22 = sadd.s32 1, %s18
    $region7: #{tpu_custom_call.1} parent=1 // loop_footer_branch
      %17 = sbr.rel target = $region3
    $region8: #{tpu_custom_call.1} parent=1 // loop_exit
      _
    %687 = vsyncpa [#allocation6], 1
    %s688 = scalar_lea.sflag [#allocation6], 1
    %689 = vsyncpa %s688, 1
    %690 = vsyncpa [#allocation7], 1
    %s691 = scalar_lea.sflag [#allocation7], 1
    %692 = vsyncpa %s691, 1

</llo_original>
